<compile_context>
chip_gen: v7x
topology: tpu7x:2x2x1
jax: 0.10.0
libtpu: 0.0.40
codegen_flags: <defaults>
</compile_context>

<pallas_src>
import functools

import jax
import jax.numpy as jnp
from jax.experimental import pallas as pl
from jax.experimental.pallas import tpu as pltpu

_NEG_INF = -1e30  # finite "-inf" baked into padded class-lane biases


def _round_up(x: int, m: int) -> int:
    return (x + m - 1) // m * m


def _mlp_kernel(x_ref, w1_ref, b1_ref, w2_ref, b2_ref, o_ref):
    # ---- linear1: x @ W1 + b1 (MXU, bf16 inputs / f32 accumulation) ----
    x = x_ref[...].astype(w1_ref.dtype)            # cast to bf16 in-vreg (no wrapper pass)
    h = jnp.dot(x, w1_ref[...], preferred_element_type=jnp.float32)
    h = h + b1_ref[...]                            # (1, H_pad) f32 bias broadcasts over rows

    # ---- dropout: identity in eval mode ----

    # ---- relu (f32 on the VPU) ----
    h = jnp.maximum(h, 0.0)

    # ---- linear2: relu(h) @ W2 + b2 (MXU, bf16 inputs / f32 accumulation) ----
    logits = jnp.dot(h.astype(w2_ref.dtype), w2_ref[...],
                     preferred_element_type=jnp.float32)
    # Padded class lanes: W2 padded columns are zero and b2 carries -1e30 there,
    # so those logits are exactly -1e30 and exp() underflows to 0 — no in-kernel
    # iota/where mask needed.
    logits = logits + b2_ref[...]

    # ---- numerically-stable softmax over dim=1 (class axis), f32 ----
    m = jnp.max(logits, axis=1, keepdims=True)
    e = jnp.exp(logits - m)
    denom = jnp.sum(e, axis=1, keepdims=True)
    # Exact divide (not approx reciprocal) so each row sums to 1 to f32 precision.
    o_ref[...] = (e / denom).astype(o_ref.dtype)


def prepare_mlp_params(w1, b1, w2, b2):
    """One-time pad + cast of the weights (hoisted out of the per-call path).

    w1: (E, H); b1: (H,); w2: (H, T); b2: (T,)  [already (in, out) layout]
    """
    E, H = w1.shape
    T = w2.shape[1]
    # Lane-dense padding for matmul-1 N and the output lanes only; E is left
    # unpadded (full-extent last dim on the x block is legal and avoids 4x DMA).
    # On v6e/v7x large H/T could be rounded to 256 instead (256x256 MXU); kept
    # at 128 here since the demo dims are tiny.
    H_pad = _round_up(H, 128)
    T_pad = _round_up(T, 128)

    w1p = jnp.zeros((E, H_pad), jnp.bfloat16).at[:, :H].set(w1.astype(jnp.bfloat16))
    b1p = jnp.zeros((1, H_pad), jnp.float32).at[0, :H].set(b1.astype(jnp.float32))
    w2p = jnp.zeros((H_pad, T_pad), jnp.bfloat16).at[:H, :T].set(w2.astype(jnp.bfloat16))
    # Bake the padded-class softmax mask into the bias.
    b2p = jnp.full((1, T_pad), _NEG_INF, jnp.float32).at[0, :T].set(b2.astype(jnp.float32))
    return w1p, b1p, w2p, b2p


@functools.partial(jax.jit, static_argnames=("t_real", "block_rows"))
def mlp_forward(x, w1p, b1p, w2p, b2p, *, t_real, block_rows=512):
    """x: (B, E) -> softmax probs (B, t_real) in x.dtype."""
    B, E = x.shape
    H_pad = w1p.shape[1]
    T_pad = w2p.shape[1]

    block_rows = _round_up(block_rows, 8)
    B8 = _round_up(max(B, 8), 8)
    tm = min(block_rows, B8)
    # Prefer >=2 batch tiles so "parallel" can shard across both TensorCores (v7x).
    if B8 // tm < 2 and B8 >= 16:
        tm = _round_up((B8 + 1) // 2, 8)
    B_pad = _round_up(B, tm)
    grid = (B_pad // tm,)

    # Pad the batch only when needed (no blanket round-up to a big tile).
    xp = x if B_pad == B else jnp.zeros((B_pad, E), x.dtype).at[:B].set(x)

    x_bytes = jnp.dtype(x.dtype).itemsize
    out_bytes = x_bytes

    # VMEM budget: single-buffered resident weights/biases, double-buffered
    # x / out tiles, plus the f32 intermediates (h and logits), with margin.
    resident = (w1p.size * 2 + w2p.size * 2 + b1p.size * 4 + b2p.size * 4)
    tiles = 2 * tm * E * x_bytes + 2 * tm * T_pad * out_bytes
    interm = tm * H_pad * 4 + 2 * tm * T_pad * 4
    vmem_needed = resident + tiles + interm
    vmem_limit = int(min(64 * 1024 * 1024,
                         max(32 * 1024 * 1024, 2 * vmem_needed + (4 << 20))))

    bytes_accessed = (B_pad * E * x_bytes + resident + B_pad * T_pad * out_bytes)

    out_padded = pl.pallas_call(
        _mlp_kernel,
        # Emit directly in the caller's dtype — halves the HBM write when bf16
        # and removes the downstream cast.
        out_shape=jax.ShapeDtypeStruct((B_pad, T_pad), x.dtype),
        grid=grid,
        in_specs=[
            # x tile, double-buffered / pipelined over the batch grid.
            pl.BlockSpec((tm, E), lambda i: (i, 0)),
            # Resident operands: constant index_map, single buffer (saves VMEM).
            pl.BlockSpec((E, H_pad), lambda i: (0, 0),
                         pipeline_mode=pl.Buffered(1)),
            pl.BlockSpec((1, H_pad), lambda i: (0, 0),
                         pipeline_mode=pl.Buffered(1)),
            pl.BlockSpec((H_pad, T_pad), lambda i: (0, 0),
                         pipeline_mode=pl.Buffered(1)),
            pl.BlockSpec((1, T_pad), lambda i: (0, 0),
                         pipeline_mode=pl.Buffered(1)),
        ],
        # Lane-dense (128-wide) output tile -> unmasked vst.
        out_specs=pl.BlockSpec((tm, T_pad), lambda i: (i, 0)),
        compiler_params=pltpu.CompilerParams(
            dimension_semantics=("parallel",),
            vmem_limit_bytes=vmem_limit,
        ),
        cost_estimate=pl.CostEstimate(
            flops=2 * B_pad * (E * H_pad + H_pad * T_pad),
            transcendentals=B_pad * T_pad,
            bytes_accessed=int(bytes_accessed),
        ),
    )(xp, w1p, b1p, w2p, b2p)

    return out_padded[:B, :t_real]


if __name__ == "__main__":
    # Small shapes consistent with the module.
    batch, embed_dim, hidden_dim, tagset_size = 8, 32, 64, 16
    dropout = 0.1  # identity at inference

    key = jax.random.PRNGKey(0)
    kx, kw1, kb1, kw2, kb2 = jax.random.split(key, 5)

    x = jax.random.normal(kx, (batch, embed_dim), dtype=jnp.float32)

    # nn.Linear stores W as (out, in); the kernel consumes the transposed (in, out) form.
    w1 = (jax.random.normal(kw1, (hidden_dim, embed_dim), dtype=jnp.float32) * 0.1).T
    b1 = jax.random.normal(kb1, (hidden_dim,), dtype=jnp.float32) * 0.1
    w2 = (jax.random.normal(kw2, (tagset_size, hidden_dim), dtype=jnp.float32) * 0.1).T
    b2 = jax.random.normal(kb2, (tagset_size,), dtype=jnp.float32) * 0.1

    # One-time parameter prep (pad + cast hoisted out of the per-call path).
    w1p, b1p, w2p, b2p = prepare_mlp_params(w1, b1, w2, b2)

    out = mlp_forward(x, w1p, b1p, w2p, b2p, t_real=tagset_size)
    jax.block_until_ready(out)

    # Pure-JAX f32 reference (eval-mode dropout == identity).
    h_ref = jnp.maximum(x @ w1 + b1, 0.0)
    ref = jax.nn.softmax(h_ref @ w2 + b2, axis=1)

    assert out.shape == (batch, tagset_size)
    assert jnp.allclose(jnp.sum(out, axis=1), 1.0, atol=1e-4)      # exact normalization
    assert jnp.allclose(out, ref, atol=2e-2, rtol=2e-2)            # bf16 MXU, f32 accumulation

    print("KERNEL_OK")
</pallas_src>

<mosaic_0001>
module attributes {stable_mosaic.version = 11 : i64} {
  func.func @_mlp_kernel(%arg0: i32, %arg1: memref<8x32xf32, #tpu.memory_space<vmem>>, %arg2: memref<32x128xbf16, #tpu.memory_space<vmem>>, %arg3: memref<1x128xf32, #tpu.memory_space<vmem>>, %arg4: memref<128x128xbf16, #tpu.memory_space<vmem>>, %arg5: memref<1x128xf32, #tpu.memory_space<vmem>>, %arg6: memref<8x128xf32, #tpu.memory_space<vmem>>) attributes {dimension_semantics = [#tpu.dimension_semantics<parallel>], iteration_bounds = array<i64: 1>, scalar_prefetch = 0 : i64, scratch_operands = 0 : i64, tpu.core_type = #tpu.core_type<tc>, window_params = [{transform_indices = @transform_0, window_bounds = array<i64: 8, 32>}, {pipeline_mode = #tpu.pipeline_mode<synchronous>, transform_indices = @transform_1, window_bounds = array<i64: 32, 128>}, {pipeline_mode = #tpu.pipeline_mode<synchronous>, transform_indices = @transform_2, window_bounds = array<i64: 1, 128>}, {pipeline_mode = #tpu.pipeline_mode<synchronous>, transform_indices = @transform_3, window_bounds = array<i64: 128, 128>}, {pipeline_mode = #tpu.pipeline_mode<synchronous>, transform_indices = @transform_4, window_bounds = array<i64: 1, 128>}, {transform_indices = @transform_5, window_bounds = array<i64: 8, 128>}]} {
    %c0 = arith.constant 0 : index
    %c0_0 = arith.constant 0 : index
    %0 = vector.load %arg1[%c0, %c0_0] : memref<8x32xf32, #tpu.memory_space<vmem>>, vector<8x32xf32>
    %1 = arith.truncf %0 : vector<8x32xf32> to vector<8x32xbf16>
    %c0_1 = arith.constant 0 : index
    %c0_2 = arith.constant 0 : index
    %2 = vector.load %arg2[%c0_1, %c0_2] : memref<32x128xbf16, #tpu.memory_space<vmem>>, vector<32x128xbf16>
    %cst = arith.constant dense<0.000000e+00> : vector<8x128xf32>
    %3 = tpu.matmul %1, %2, %cst {dimension_numbers = #tpu.dot_dimension_numbers<[1], [0], [0], [1], [0, 0, 1, 1], [], []>} : vector<8x32xbf16>, vector<32x128xbf16>, vector<8x128xf32> -> vector<8x128xf32>
    %c0_3 = arith.constant 0 : index
    %c0_4 = arith.constant 0 : index
    %4 = vector.load %arg3[%c0_3, %c0_4] : memref<1x128xf32, #tpu.memory_space<vmem>>, vector<1x128xf32>
    %5 = vector.broadcast %4 : vector<1x128xf32> to vector<8x128xf32>
    %6 = arith.addf %3, %5 : vector<8x128xf32>
    %cst_5 = arith.constant 0.000000e+00 : f32
    %7 = vector.broadcast %cst_5 : f32 to vector<8x128xf32>
    %8 = arith.maximumf %6, %7 : vector<8x128xf32>
    %9 = arith.truncf %8 : vector<8x128xf32> to vector<8x128xbf16>
    %c0_6 = arith.constant 0 : index
    %c0_7 = arith.constant 0 : index
    %10 = vector.load %arg4[%c0_6, %c0_7] : memref<128x128xbf16, #tpu.memory_space<vmem>>, vector<128x128xbf16>
    %cst_8 = arith.constant dense<0.000000e+00> : vector<8x128xf32>
    %11 = tpu.matmul %9, %10, %cst_8 {dimension_numbers = #tpu.dot_dimension_numbers<[1], [0], [0], [1], [0, 0, 1, 1], [], []>} : vector<8x128xbf16>, vector<128x128xbf16>, vector<8x128xf32> -> vector<8x128xf32>
    %c0_9 = arith.constant 0 : index
    %c0_10 = arith.constant 0 : index
    %12 = vector.load %arg5[%c0_9, %c0_10] : memref<1x128xf32, #tpu.memory_space<vmem>>, vector<1x128xf32>
    %13 = vector.broadcast %12 : vector<1x128xf32> to vector<8x128xf32>
    %14 = arith.addf %11, %13 : vector<8x128xf32>
    %cst_11 = arith.constant dense<0xFF800000> : vector<8xf32>
    %15 = vector.multi_reduction <maximumf>, %14, %cst_11 [1] : vector<8x128xf32> to vector<8xf32>
    %16 = vector.shape_cast %15 : vector<8xf32> to vector<8x1xf32>
    %17 = vector.broadcast %16 : vector<8x1xf32> to vector<8x128xf32>
    %18 = arith.subf %14, %17 : vector<8x128xf32>
    %19 = math.exp %18 : vector<8x128xf32>
    %cst_12 = arith.constant dense<0.000000e+00> : vector<8xf32>
    %20 = vector.multi_reduction <add>, %19, %cst_12 [1] : vector<8x128xf32> to vector<8xf32>
    %21 = vector.shape_cast %20 : vector<8xf32> to vector<8x1xf32>
    %22 = vector.broadcast %21 : vector<8x1xf32> to vector<8x128xf32>
    %23 = arith.divf %19, %22 : vector<8x128xf32>
    %c0_13 = arith.constant 0 : index
    %c0_14 = arith.constant 0 : index
    %24 = vector.load %arg6[%c0_13, %c0_14] : memref<8x128xf32, #tpu.memory_space<vmem>>, vector<8x128xf32>
    tpu.vector_store %arg6[%c0_13, %c0_14], %23 {strides = array<i32>} : memref<8x128xf32, #tpu.memory_space<vmem>>, vector<8x128xf32>,
    return
  }
  func.func @transform_0(%arg0: i32) -> (i32, i32) {
    %c0_i32 = arith.constant 0 : i32
    %c0_i32_0 = arith.constant 0 : i32
    return %arg0, %c0_i32 : i32, i32
  }
  func.func @transform_1(%arg0: i32) -> (i32, i32) {
    %c0_i32 = arith.constant 0 : i32
    %c0_i32_0 = arith.constant 0 : i32
    %c0_i32_1 = arith.constant 0 : i32
    return %c0_i32, %c0_i32_0 : i32, i32
  }
  func.func @transform_2(%arg0: i32) -> (i32, i32) {
    %c0_i32 = arith.constant 0 : i32
    %c0_i32_0 = arith.constant 0 : i32
    %c0_i32_1 = arith.constant 0 : i32
    return %c0_i32, %c0_i32_0 : i32, i32
  }
  func.func @transform_3(%arg0: i32) -> (i32, i32) {
    %c0_i32 = arith.constant 0 : i32
    %c0_i32_0 = arith.constant 0 : i32
    %c0_i32_1 = arith.constant 0 : i32
    return %c0_i32, %c0_i32_0 : i32, i32
  }
  func.func @transform_4(%arg0: i32) -> (i32, i32) {
    %c0_i32 = arith.constant 0 : i32
    %c0_i32_0 = arith.constant 0 : i32
    %c0_i32_1 = arith.constant 0 : i32
    return %c0_i32, %c0_i32_0 : i32, i32
  }
  func.func @transform_5(%arg0: i32) -> (i32, i32) {
    %c0_i32 = arith.constant 0 : i32
    %c0_i32_0 = arith.constant 0 : i32
    return %arg0, %c0_i32 : i32, i32
  }
}

</mosaic_0001>

<llo_original>
// kernel: mlp_forward.1
$region0: #{mlp_forward.1}
  #allocation0 [shape = 'u32[]', space=smem, size = 0x4, offset = 0x4, fixed_abs, tag = 'smem constant byte address 0x4 - core index']
  #allocation1 [shape = 'u32[144,128]{1,0:T(1,128)}', space=vmem, size = 0x12000, scoped, tag = 'internal scratch']
  %s0 = inlined_call_operand.hbm [shape: f32[8,32], index: 0, kind: input, shape index: {}]
  %s1 = inlined_call_operand.hbm [shape: bf16[32,128], index: 1, kind: input, shape index: {}]
  %s2 = inlined_call_operand.vmem [shape: f32[1,128], index: 2, kind: input, shape index: {}]
  %s3 = inlined_call_operand.hbm [shape: bf16[128,128], index: 3, kind: input, shape index: {}]
  %s4 = inlined_call_operand.vmem [shape: f32[1,128], index: 4, kind: input, shape index: {}]
  %s5 = inlined_call_operand.hbm [shape: f32[8,128], index: 5, kind: output, shape index: {}]
  %s6 = sld [smem:[#allocation0]]
  $region42: #{mlp_forward.1} parent=0
    _
  %s8 = ssub.s32 1, %s6
  %s9 = scalar_select 0, %s8, %s6
  $region1: #{mlp_forward.1} parent=0
    #allocation2 [shape = 'u8[4096]{0}', space=vmem, size = 0x1000, scoped, tag = 'input window, operand 0, single buffered']
    #allocation3 [shape = 's32[1]{0}', space=sflag, size = 0x4, scoped, tag = 'scoped memory for mlp_forward.1']
    #allocation4 [shape = 's32[1]{0}', space=sflag, size = 0x4, scoped, tag = 'scoped memory for mlp_forward.1']
    #allocation5 [shape = 'u8[8192]{0}', space=vmem, size = 0x2000, scoped, tag = 'input window, operand 1, single buffered']
    #allocation6 [shape = 's32[1]{0}', space=sflag, size = 0x4, scoped, tag = 'scoped memory for mlp_forward.1']
    #allocation7 [shape = 'u8[32768]{0}', space=vmem, size = 0x8000, scoped, tag = 'input window, operand 3, single buffered']
    #allocation8 [shape = 'u8[4096]{0}', space=vmem, size = 0x1000, scoped, tag = 'output window, operand 0, single buffered']
    %10 = vsyncpa [#allocation3], 0
    %11 = vsyncpa [#allocation6], 0
    %12 = vsyncpa [#allocation4], 0
    // Predicated region
    $region2: #{mlp_forward.1} parent=1 // pred_check
      _
    $region3: #{mlp_forward.1} parent=1 // pred_check_branch
      %14 = sbr.rel (0) target = $region5
    $region4: #{mlp_forward.1} parent=1 // pred_region
      %s16 = ssub.s32 128, 128
      %17 = vsyncadd [#allocation3], %s16
      %s19 = sshll.u32 [#allocation2], 4
      %s20 = int_to_ptr.vmem [resolvable:$true] %s19
      %22 = dma.hbm_to_vmem [thread:$0]  %s0, 128, %s20, [#allocation3]
    $region5: #{mlp_forward.1} parent=1 // pred_fallthru
      _
    // Predicated region
    $region6: #{mlp_forward.1} parent=1 // pred_check
      _
    $region7: #{mlp_forward.1} parent=1 // pred_check_branch
      %24 = sbr.rel (0) target = $region9
    $region8: #{mlp_forward.1} parent=1 // pred_region
      %s26 = ssub.s32 256, 256
      %27 = vsyncadd [#allocation6], %s26
      %s28 = sshll.u32 [#allocation5], 4
      %s29 = int_to_ptr.vmem [resolvable:$true] %s28
      %34 = dma.hbm_to_vmem [thread:$0]  %s1, 256, %s29, [#allocation6], 64, 64, 4
    $region9: #{mlp_forward.1} parent=1 // pred_fallthru
      _
    // Predicated region
    $region10: #{mlp_forward.1} parent=1 // pred_check
      _
    $region11: #{mlp_forward.1} parent=1 // pred_check_branch
      %36 = sbr.rel (0) target = $region13
    $region12: #{mlp_forward.1} parent=1 // pred_region
      _
    $region13: #{mlp_forward.1} parent=1 // pred_fallthru
      _
    // Predicated region
    $region14: #{mlp_forward.1} parent=1 // pred_check
      _
    $region15: #{mlp_forward.1} parent=1 // pred_check_branch
      %38 = sbr.rel (0) target = $region17
    $region16: #{mlp_forward.1} parent=1 // pred_region
      %s40 = ssub.s32 1024, 1024
      %41 = vsyncadd [#allocation6], %s40
      %s42 = sshll.u32 [#allocation7], 4
      %s43 = int_to_ptr.vmem [resolvable:$true] %s42
      %48 = dma.hbm_to_vmem [thread:$0]  %s3, 1024, %s43, [#allocation6], 64, 64, 4
    $region17: #{mlp_forward.1} parent=1 // pred_fallthru
      _
    // Predicated region
    $region18: #{mlp_forward.1} parent=1 // pred_check
      _
    $region19: #{mlp_forward.1} parent=1 // pred_check_branch
      %50 = sbr.rel (0) target = $region21
    $region20: #{mlp_forward.1} parent=1 // pred_region
      _
    $region21: #{mlp_forward.1} parent=1 // pred_fallthru
      _
    // Predicated region
    $region22: #{mlp_forward.1} parent=1 // pred_check
      _
    $region23: #{mlp_forward.1} parent=1 // pred_check_branch
      %52 = sbr.rel (0) target = $region25
    $region24: #{mlp_forward.1} parent=1 // pred_region
      %53 = dma.done [#allocation3], 128
    $region25: #{mlp_forward.1} parent=1 // pred_fallthru
      _
    // Predicated region
    $region26: #{mlp_forward.1} parent=1 // pred_check
      _
    $region27: #{mlp_forward.1} parent=1 // pred_check_branch
      %55 = sbr.rel (0) target = $region29
    $region28: #{mlp_forward.1} parent=1 // pred_region
      %56 = dma.done [#allocation6], 256
    $region29: #{mlp_forward.1} parent=1 // pred_fallthru
      _
    // Predicated region
    $region30: #{mlp_forward.1} parent=1 // pred_check
      _
    $region31: #{mlp_forward.1} parent=1 // pred_check_branch
      %58 = sbr.rel (0) target = $region33
    $region32: #{mlp_forward.1} parent=1 // pred_region
      %59 = dma.done [#allocation6], 1024
    $region33: #{mlp_forward.1} parent=1 // pred_fallthru
      _
    %v61 = vld [vmem:[#allocation2] sm:$0xff]
    %v62 = vpack.c.bf16 %v61, %v61
    %v63 = vld [vmem:[#allocation5] sm:$0xf]
    %v64 = vld [vmem:[#allocation5 + $0x4] sm:$0xf]
    %v65 = vld [vmem:[#allocation5 + $0x8] sm:$0xf]
    %v66 = vld [vmem:[#allocation5 + $0xc] sm:$0xf]
    %v67 = vld [vmem:[%s2] sm:$0x1]
    %v69 = vlaneseq
    %v70 = vshrl.u32 %v69, 7
    %v71 = vsub.s32 0, %v70
    %v72 = vrot.slane %v67, %v71
    %v78 = vunpack.c.l.b16 %v63
    %v79 = vunpack.c.l.b16 %v64
    %v80 = vunpack.c.l.b16 %v65
    %v81 = vunpack.c.l.b16 %v66
    %v82 = vpack.c.b16 %v79, %v78
    %v83 = vpack.c.b16 %v81, %v80
    %vm86 = vcmask 261120
    %v88 = vsel %vm86, %v62, 0
    %90 = vmatprep.subr.bf16.mxu0 0
    %91 = vmatpush1.bf16.msra.mxu0 %v82
    %92 = vmatprep.subr.bf16.mxu0 0
    %93 = vmatpush1.bf16.msra.mxu0 %v83
    %94 = vmatprep.subr.bf16.mxu0 0
    %95 = vmatpush1.bf16.msra.mxu0 0
    %96 = vmatprep.subr.bf16.mxu0 0
    %97 = vmatpush1.bf16.msra.mxu0 0
    %98 = vmatprep.subr.bf16.mxu0 0
    %99 = vmatpush1.bf16.msra.mxu0 0
    %100 = vmatprep.subr.bf16.mxu0 0
    %101 = vmatpush1.bf16.msra.mxu0 0
    %102 = vmatprep.subr.bf16.mxu0 0
    %103 = vmatpush1.bf16.msra.mxu0 0
    %104 = vmatprep.subr.bf16.mxu0 0
    %105 = vmatpush1.bf16.msra.mxu0 0
    %106 = vmatprep.subr.bf16.mxu0 0
    %107 = vmatpush1.bf16.msra.mxu0 0
    %108 = vmatprep.subr.bf16.mxu0 0
    %109 = vmatpush1.bf16.msra.mxu0 0
    %110 = vmatprep.subr.bf16.mxu0 0
    %111 = vmatpush1.bf16.msra.mxu0 0
    %112 = vmatprep.subr.bf16.mxu0 0
    %113 = vmatpush1.bf16.msra.mxu0 0
    %114 = vmatprep.subr.bf16.mxu0 0
    %115 = vmatpush1.bf16.msra.mxu0 0
    %116 = vmatprep.subr.bf16.mxu0 0
    %117 = vmatpush1.bf16.msra.mxu0 0
    %118 = vmatprep.subr.bf16.mxu0 0
    %119 = vmatpush1.bf16.msra.mxu0 0
    %120 = vmatprep.subr.bf16.mxu0 0
    %121 = vmatpush1.bf16.msra.mxu0 0
    %122 = vmatprep.mubr.bf16.mxu0 0
    %123 = vmatmul.mubr.bf16.gmra.mrb[0].mxu0 %v88
    %v124 = vpop.f32.mrb[0].mxu0
    %v125 = vadd.f32 %v72, %v124
    %v126 = vpop.f32.mrb[0].mxu0
    %v127 = vpop.f32.mrb[0].mxu0
    %v128 = vpop.f32.mrb[0].mxu0
    %129 = vdwg.mxu0
    %v130 = vmax.f32 %v125, 0.0
    %v131 = vpack.c.bf16 %v130, %v130
    %v132 = vld [vmem:[#allocation7] sm:$0xf]
    %v133 = vld [vmem:[#allocation7 + $0x4] sm:$0xf]
    %v134 = vld [vmem:[#allocation7 + $0x8] sm:$0xf]
    %v135 = vld [vmem:[#allocation7 + $0xc] sm:$0xf]
    %v136 = vld [vmem:[#allocation7 + $0x10] sm:$0xf]
    %v137 = vld [vmem:[#allocation7 + $0x14] sm:$0xf]
    %v138 = vld [vmem:[#allocation7 + $0x18] sm:$0xf]
    %v139 = vld [vmem:[#allocation7 + $0x1c] sm:$0xf]
    %v140 = vld [vmem:[#allocation7 + $0x20] sm:$0xf]
    %v141 = vld [vmem:[#allocation7 + $0x24] sm:$0xf]
    %v142 = vld [vmem:[#allocation7 + $0x28] sm:$0xf]
    %v143 = vld [vmem:[#allocation7 + $0x2c] sm:$0xf]
    %v144 = vld [vmem:[#allocation7 + $0x30] sm:$0xf]
    %v145 = vld [vmem:[#allocation7 + $0x34] sm:$0xf]
    %v146 = vld [vmem:[#allocation7 + $0x38] sm:$0xf]
    %v147 = vld [vmem:[#allocation7 + $0x3c] sm:$0xf]
    %v148 = vld [vmem:[%s4] sm:$0x1]
    %v150 = vlaneseq
    %v151 = vshrl.u32 %v150, 7
    %v152 = vsub.s32 0, %v151
    %v153 = vrot.slane %v148, %v152
    %v171 = vunpack.c.l.b16 %v132
    %v172 = vunpack.c.l.b16 %v133
    %v173 = vunpack.c.l.b16 %v134
    %v174 = vunpack.c.l.b16 %v135
    %v175 = vunpack.c.l.b16 %v136
    %v176 = vunpack.c.l.b16 %v137
    %v177 = vunpack.c.l.b16 %v138
    %v178 = vunpack.c.l.b16 %v139
    %v179 = vunpack.c.l.b16 %v140
    %v180 = vunpack.c.l.b16 %v141
    %v181 = vunpack.c.l.b16 %v142
    %v182 = vunpack.c.l.b16 %v143
    %v183 = vunpack.c.l.b16 %v144
    %v184 = vunpack.c.l.b16 %v145
    %v185 = vunpack.c.l.b16 %v146
    %v186 = vunpack.c.l.b16 %v147
    %v187 = vpack.c.b16 %v172, %v171
    %v188 = vpack.c.b16 %v174, %v173
    %v189 = vpack.c.b16 %v176, %v175
    %v190 = vpack.c.b16 %v178, %v177
    %v191 = vpack.c.b16 %v180, %v179
    %v192 = vpack.c.b16 %v182, %v181
    %v193 = vpack.c.b16 %v184, %v183
    %v194 = vpack.c.b16 %v186, %v185
    %203 = vmatprep.subr.bf16.mxu0 0
    %204 = vmatpush1.bf16.msra.mxu0 %v187
    %205 = vmatprep.subr.bf16.mxu0 0
    %206 = vmatpush1.bf16.msra.mxu0 %v188
    %207 = vmatprep.subr.bf16.mxu0 0
    %208 = vmatpush1.bf16.msra.mxu0 %v189
    %209 = vmatprep.subr.bf16.mxu0 0
    %210 = vmatpush1.bf16.msra.mxu0 %v190
    %211 = vmatprep.subr.bf16.mxu0 0
    %212 = vmatpush1.bf16.msra.mxu0 %v191
    %213 = vmatprep.subr.bf16.mxu0 0
    %214 = vmatpush1.bf16.msra.mxu0 %v192
    %215 = vmatprep.subr.bf16.mxu0 0
    %216 = vmatpush1.bf16.msra.mxu0 %v193
    %217 = vmatprep.subr.bf16.mxu0 0
    %218 = vmatpush1.bf16.msra.mxu0 %v194
    %219 = vmatprep.subr.bf16.mxu0 0
    %220 = vmatpush1.bf16.msra.mxu0 0
    %221 = vmatprep.subr.bf16.mxu0 0
    %222 = vmatpush1.bf16.msra.mxu0 0
    %223 = vmatprep.subr.bf16.mxu0 0
    %224 = vmatpush1.bf16.msra.mxu0 0
    %225 = vmatprep.subr.bf16.mxu0 0
    %226 = vmatpush1.bf16.msra.mxu0 0
    %227 = vmatprep.subr.bf16.mxu0 0
    %228 = vmatpush1.bf16.msra.mxu0 0
    %229 = vmatprep.subr.bf16.mxu0 0
    %230 = vmatpush1.bf16.msra.mxu0 0
    %231 = vmatprep.subr.bf16.mxu0 0
    %232 = vmatpush1.bf16.msra.mxu0 0
    %233 = vmatprep.subr.bf16.mxu0 0
    %234 = vmatpush1.bf16.msra.mxu0 0
    %235 = vmatprep.mubr.bf16.mxu0 0
    %236 = vmatmul.mubr.bf16.gmra.mrb[0].mxu0 %v131
    %v237 = vpop.f32.mrb[0].mxu0
    %v238 = vadd.f32 %v153, %v237
    %v239 = vpop.f32.mrb[0].mxu0
    %v240 = vpop.f32.mrb[0].mxu0
    %v241 = vpop.f32.mrb[0].mxu0
    %242 = vdwg.mxu0
    %243 = vmax.xlane.f32.xlu0 %v238
    %v244 = vpop.xlane.xlu0 %243
    %v245 = vsub.f32 %v238, %v244
    %v246 = vmul.f32 %v245, 1.442695
    %v247 = vpow.pop %v246
    %248 = vadd.xlane.f32.xlu0 %v247
    %v249 = vpop.xlane.xlu0 %248
    %v250 = vrcp.pop %v249
    %v251 = vmul.f32 %v247, %v250
    %252 = vst [vmem:[#allocation8] sm:$0xff] %v251
    // Predicated region
    $region34: #{mlp_forward.1} parent=1 // pred_check
      _
    $region35: #{mlp_forward.1} parent=1 // pred_check_branch
      %254 = sbr.rel (0) target = $region37
    $region36: #{mlp_forward.1} parent=1 // pred_region
      %s256 = ssub.s32 128, 128
      %257 = vsyncadd [#allocation4], %s256
      %s259 = sshll.u32 [#allocation8], 4
      %s260 = int_to_ptr.vmem [resolvable:$true] %s259
      %262 = dma.vmem_to_hbm [thread:$0]  %s260, 128, %s5, [#allocation4]
    $region37: #{mlp_forward.1} parent=1 // pred_fallthru
      _
    // Predicated region
    $region38: #{mlp_forward.1} parent=1 // pred_check
      _
    $region39: #{mlp_forward.1} parent=1 // pred_check_branch
      %264 = sbr.rel (0) target = $region41
    $region40: #{mlp_forward.1} parent=1 // pred_region
      %265 = dma.done [#allocation4], 128
    $region41: #{mlp_forward.1} parent=1 // pred_fallthru
      _
    %266 = vsyncpa [#allocation3], 1
    %267 = vsyncpa [#allocation6], 1
    %268 = vsyncpa [#allocation4], 1

</llo_original>
